<compile_context>
chip_gen: v6e
topology: v6e:2x2x1
jax: 0.10.0
libtpu: 0.0.40
codegen_flags: <defaults>
</compile_context>

<pallas_src>
import functools

import jax
import jax.numpy as jnp
from jax.experimental import pallas as pl
from jax.experimental.pallas import tpu as pltpu

NUM_BITS = 8
RANK = 4


def qlora_kernel(scale_ref, x_ref, w_ref, xb_ref, a_ref, bias_ref, o_ref):
    """One (tm, tn) output tile; K is reduced over the innermost grid axis.

    scale_ref : SMEM (1,)      f32   quantization scale (epilogue only)
    x_ref     : VMEM (tm, tk)  bf16  activation tile
    w_ref     : VMEM (tk, tn)  int8  quantized weight, pre-transposed to [K, N]
    xb_ref    : VMEM (tm, r)   f32   precomputed LoRA down-projection x @ B
    a_ref     : VMEM (r,  tn)  f32   LoRA A tile
    bias_ref  : VMEM (1,  tn)  f32
    o_ref     : VMEM (tm, tn)  f32   output tile, VMEM-resident across K
                                     (doubles as the f32 accumulator)
    """
    k = pl.program_id(2)

    @pl.when(k == 0)
    def _init():
        o_ref[...] = jnp.zeros_like(o_ref)

    x = x_ref[...]
    # Dequant is a pure int8 -> bf16 cast (exact, int8 fits in bf16); the
    # scalar `scale` is folded into the epilogue.
    w = w_ref[...].astype(x.dtype)
    o_ref[...] += jnp.dot(x, w, preferred_element_type=jnp.float32)

    @pl.when(k == pl.num_programs(2) - 1)
    def _finalize():
        # LoRA up-projection as r rank-1 VPU updates (f32), keeping the MXU
        # free and avoiding an f32 multi-pass matmul.
        xb = xb_ref[...]                       # (tm, r) f32
        a = a_ref[...]                         # (r, tn) f32
        lora = xb[:, 0:1] * a[0:1, :]
        for rr in range(1, a.shape[0]):        # r is a static, tiny constant
            lora = lora + xb[:, rr:rr + 1] * a[rr:rr + 1, :]
        o_ref[...] = (o_ref[...] * scale_ref[0] + lora
                      + bias_ref[...]).astype(o_ref.dtype)


def quantize_and_pack(weight, num_bits=NUM_BITS):
    """OPTQ-style quantization of a PyTorch-layout [out, in] weight.

    Returns the quantized weight pre-transposed to [in, out] = [K, N] (a
    one-time cost at load time) plus the f32 scale.
    """
    scale = jnp.max(jnp.abs(weight)) / (2 ** (num_bits - 1) - 1)
    quantized = jnp.round(weight / scale).astype(jnp.int8)        # [N, K]
    return jnp.transpose(quantized), scale.astype(jnp.float32)    # [K, N]


def _clamp_tile(t, dim, quantum):
    """Largest tile <= t that divides `dim` and respects the layout quantum."""
    t = min(t, dim)
    if t >= dim:
        return dim
    while t >= quantum:
        if dim % t == 0 and t % quantum == 0:
            return t
        t //= 2
    return dim  # a full (untiled) dimension is always a legal block size


def _ceil_to(n, q):
    return -(-n // q) * q


def _padded_tile_bytes(rows, cols, itemsize):
    """VMEM bytes of a (rows, cols) tile after (sublane, lane) padding."""
    sublane_quantum = 8 * max(1, 4 // itemsize)   # 8 (f32) / 16 (bf16) / 32 (i8)
    return _ceil_to(rows, sublane_quantum) * _ceil_to(cols, 128) * itemsize


def _vmem_capacity_bytes():
    try:
        cap = getattr(pltpu.get_tpu_info(), "vmem_capacity_bytes", None)
        if cap:
            return int(cap)
    except Exception:
        pass
    return 64 * 1024 * 1024   # conservative (v7x per-TC) fallback


@functools.partial(jax.jit, static_argnames=("tm", "tn", "tk", "compute_dtype"))
def qlora_forward(x, qweight_kn, scale, B, A, bias, *,
                  tm=512, tn=1024, tk=1024, compute_dtype=jnp.bfloat16):
    """Fused QLoRA linear: x @ deq(W_q).T + (x @ B) @ A + bias.

    x          : [M, K] float (cast to `compute_dtype` for the MXU)
    qweight_kn : [K, N] int8  (from quantize_and_pack, i.e. W_q pre-transposed)
    scale      : scalar f32
    B          : [K, r] f32,  A : [r, N] f32,  bias : [N] f32 or None
    Returns [M, N] f32 (accumulation is always f32).
    """
    M, K = x.shape
    K2, N = qweight_kn.shape
    r = A.shape[0]
    assert K == K2 and B.shape == (K, r) and A.shape == (r, N)

    isz = jnp.dtype(compute_dtype).itemsize
    # bf16-aware sublane quantum for the x/M axis.
    tm = _clamp_tile(tm, M, 8 * max(1, 4 // isz))
    tn = _clamp_tile(tn, N, 128)
    tk = _clamp_tile(tk, K, 128)
    grid = (M // tm, N // tn, K // tk)

    x_c = x if x.dtype == compute_dtype else x.astype(compute_dtype)
    scale1 = jnp.asarray(scale, jnp.float32).reshape(1)
    bias2d = (jnp.zeros((1, N), jnp.float32) if bias is None
              else bias.reshape(1, N).astype(jnp.float32))
    A = A.astype(jnp.float32)

    # LoRA down-projection precomputed once outside the kernel (tiny [M, r]
    # f32 matmul in XLA) instead of a per-K-step, per-N-tile MXU dot.
    xb = jnp.dot(x.astype(jnp.float32), B.astype(jnp.float32),
                 preferred_element_type=jnp.float32)             # [M, r]

    # Padding-aware VMEM budget: double-buffered inputs/outputs plus the
    # in-kernel bf16 dequant temporary, capped per TPU generation.
    tile_bytes = (_padded_tile_bytes(tm, tk, isz)     # x
                  + _padded_tile_bytes(tk, tn, 1)     # int8 weight
                  + _padded_tile_bytes(tm, r, 4)      # xb (lane-padded to 128)
                  + _padded_tile_bytes(r, tn, 4)      # A  (sublane-padded to 8)
                  + _padded_tile_bytes(1, tn, 4)      # bias
                  + _padded_tile_bytes(tm, tn, 4))    # output / accumulator
    dequant_tmp = _padded_tile_bytes(tk, tn, isz)     # w.astype(bf16) temp
    vmem_need = 2 * tile_bytes + dequant_tmp + (2 << 20)
    vmem_cap = _vmem_capacity_bytes()
    vmem_limit = int(min(max(vmem_need, 32 * 1024 * 1024),
                         int(vmem_cap * 0.8)))

    # Advisory cost estimate with the actual 3-D-grid reuse factors.
    cost = pl.CostEstimate(
        flops=2 * M * N * K          # base matmul
              + 2 * M * r * N        # rank-1 LoRA epilogue
              + 3 * M * N,           # scale + bias
        transcendentals=0,
        bytes_accessed=(M * K * isz * (N // tn)        # x read once per j
                        + K * N * 1 * (M // tm)        # weight read once per i
                        + M * r * 4 * (N // tn)
                        + r * N * 4 * (M // tm)
                        + N * 4 * (M // tm)
                        + M * N * 4),
    )

    return pl.pallas_call(
        qlora_kernel,
        out_shape=jax.ShapeDtypeStruct((M, N), jnp.float32),
        grid=grid,
        in_specs=[
            pl.BlockSpec(memory_space=pltpu.MemorySpace.SMEM),   # scale
            pl.BlockSpec((tm, tk), lambda i, j, k: (i, k)),      # x
            pl.BlockSpec((tk, tn), lambda i, j, k: (k, j)),      # W_q packed [K,N]
            pl.BlockSpec((tm, r), lambda i, j, k: (i, 0)),       # xb = x @ B
            pl.BlockSpec((r, tn), lambda i, j, k: (0, j)),       # LoRA A
            pl.BlockSpec((1, tn), lambda i, j, k: (0, j)),       # bias
        ],
        out_specs=pl.BlockSpec((tm, tn), lambda i, j, k: (i, j)),
        compiler_params=pltpu.CompilerParams(
            dimension_semantics=("parallel", "parallel", "arbitrary"),
            vmem_limit_bytes=vmem_limit,
        ),
        cost_estimate=cost,
    )(scale1, x_c, qweight_kn, xb, A, bias2d)


if __name__ == "__main__":
    # Small but tile-aligned shapes so the 3-D grid is genuinely exercised:
    # with tm=64, tn=128, tk=128 the grid is (2, 2, 2) -> two K reduction
    # steps per output tile (tests the resident-output accumulation + the
    # last-k epilogue gating).
    batch, in_features, out_features = 128, 256, 256

    key = jax.random.PRNGKey(0)
    k_w, k_b, k_a, k_B, k_x = jax.random.split(key, 5)

    base_weight = jax.random.normal(k_w, (out_features, in_features), jnp.float32) * 0.1
    base_bias = jax.random.normal(k_b, (out_features,), jnp.float32) * 0.1
    A = jax.random.normal(k_a, (RANK, out_features), jnp.float32) * 0.01
    B = jax.random.normal(k_B, (in_features, RANK), jnp.float32) * 0.01

    # Activations: f32 values chosen to be exactly representable in bf16 so the
    # kernel's bf16 MXU feed stays faithful to the f32 reference below.
    x = jax.random.normal(k_x, (batch, in_features), jnp.float32)
    x = x.astype(jnp.bfloat16).astype(jnp.float32)

    # One-time quantize + pack (weight pre-transposed to [K, N]).
    qweight_kn, scale = quantize_and_pack(base_weight, NUM_BITS)

    out = qlora_forward(x, qweight_kn, scale, B, A, base_bias,
                        tm=64, tn=128, tk=128)
    out = jax.block_until_ready(out)

    # Pure-JAX f32 reference (mirrors the PyTorch forward).
    deq_kn = qweight_kn.astype(jnp.float32) * scale          # [K, N] == W_deq.T
    ref = x @ deq_kn + (x @ B) @ A + base_bias[None, :]

    assert out.shape == (batch, out_features)
    assert out.dtype == jnp.float32
    max_err = jnp.max(jnp.abs(out - ref))
    assert jnp.allclose(out, ref, atol=1e-4, rtol=1e-4), \
        f"mismatch vs reference (max |err| = {max_err})"

    print("KERNEL_OK")
</pallas_src>

<mosaic_0001>
module attributes {stable_mosaic.version = 11 : i64} {
  func.func @qlora_kernel(%arg0: i32, %arg1: i32, %arg2: i32, %arg3: memref<1xf32, #tpu.memory_space<smem>>, %arg4: memref<64x128xbf16, #tpu.memory_space<vmem>>, %arg5: memref<128x128xi8, #tpu.memory_space<vmem>>, %arg6: memref<64x4xf32, #tpu.memory_space<vmem>>, %arg7: memref<4x128xf32, #tpu.memory_space<vmem>>, %arg8: memref<1x128xf32, #tpu.memory_space<vmem>>, %arg9: memref<64x128xf32, #tpu.memory_space<vmem>>) attributes {dimension_semantics = [#tpu.dimension_semantics<parallel>, #tpu.dimension_semantics<parallel>, #tpu.dimension_semantics<arbitrary>], iteration_bounds = array<i64: 2, 2, 2>, scalar_prefetch = 0 : i64, scratch_operands = 0 : i64, tpu.core_type = #tpu.core_type<tc>, window_params = [{transform_indices = @transform_0, window_bounds = array<i64: 1>}, {transform_indices = @transform_1, window_bounds = array<i64: 64, 128>}, {transform_indices = @transform_2, window_bounds = array<i64: 128, 128>}, {transform_indices = @transform_3, window_bounds = array<i64: 64, 4>}, {transform_indices = @transform_4, window_bounds = array<i64: 4, 128>}, {transform_indices = @transform_5, window_bounds = array<i64: 1, 128>}, {transform_indices = @transform_6, window_bounds = array<i64: 64, 128>}]} {
    %c0_i32 = arith.constant 0 : i32
    %0 = arith.cmpi eq, %arg2, %c0_i32 : i32
    %1 = arith.extui %0 : i1 to i32
    %c0_i32_0 = arith.constant 0 : i32
    %2 = arith.cmpi ne, %1, %c0_i32_0 : i32
    scf.if %2 {
      %cst_9 = arith.constant 0.000000e+00 : f32
      %13 = vector.broadcast %cst_9 : f32 to vector<64x128xf32>
      %c0_10 = arith.constant 0 : index
      %c0_11 = arith.constant 0 : index
      %14 = vector.load %arg9[%c0_10, %c0_11] : memref<64x128xf32, #tpu.memory_space<vmem>>, vector<64x128xf32>
      tpu.vector_store %arg9[%c0_10, %c0_11], %13 {strides = array<i32>} : memref<64x128xf32, #tpu.memory_space<vmem>>, vector<64x128xf32>,
    } else {
    }
    %c0 = arith.constant 0 : index
    %c0_1 = arith.constant 0 : index
    %3 = vector.load %arg4[%c0, %c0_1] : memref<64x128xbf16, #tpu.memory_space<vmem>>, vector<64x128xbf16>
    %c0_2 = arith.constant 0 : index
    %c0_3 = arith.constant 0 : index
    %4 = vector.load %arg5[%c0_2, %c0_3] : memref<128x128xi8, #tpu.memory_space<vmem>>, vector<128x128xi8>
    %5 = arith.sitofp %4 : vector<128x128xi8> to vector<128x128xbf16>
    %c0_4 = arith.constant 0 : index
    %c0_5 = arith.constant 0 : index
    %6 = vector.load %arg9[%c0_4, %c0_5] : memref<64x128xf32, #tpu.memory_space<vmem>>, vector<64x128xf32>
    %cst = arith.constant dense<0.000000e+00> : vector<64x128xf32>
    %7 = tpu.matmul %3, %5, %cst {dimension_numbers = #tpu.dot_dimension_numbers<[1], [0], [0], [1], [0, 0, 1, 1], [], []>} : vector<64x128xbf16>, vector<128x128xbf16>, vector<64x128xf32> -> vector<64x128xf32>
    %8 = arith.addf %6, %7 : vector<64x128xf32>
    %c0_6 = arith.constant 0 : index
    %c0_7 = arith.constant 0 : index
    %9 = vector.load %arg9[%c0_6, %c0_7] : memref<64x128xf32, #tpu.memory_space<vmem>>, vector<64x128xf32>
    tpu.vector_store %arg9[%c0_6, %c0_7], %8 {strides = array<i32>} : memref<64x128xf32, #tpu.memory_space<vmem>>, vector<64x128xf32>,
    %c1_i32 = arith.constant 1 : i32
    %10 = arith.cmpi eq, %arg2, %c1_i32 : i32
    %11 = arith.extui %10 : i1 to i32
    %c0_i32_8 = arith.constant 0 : i32
    %12 = arith.cmpi ne, %11, %c0_i32_8 : i32
    scf.if %12 {
      %c0_9 = arith.constant 0 : index
      %c0_10 = arith.constant 0 : index
      %13 = vector.load %arg6[%c0_9, %c0_10] : memref<64x4xf32, #tpu.memory_space<vmem>>, vector<64x4xf32>
      %c0_11 = arith.constant 0 : index
      %c0_12 = arith.constant 0 : index
      %14 = vector.load %arg7[%c0_11, %c0_12] : memref<4x128xf32, #tpu.memory_space<vmem>>, vector<4x128xf32>
      %15 = vector.extract_strided_slice %13 {offsets = [0, 0], sizes = [64, 1], strides = [1, 1]} : vector<64x4xf32> to vector<64x1xf32>
      %16 = vector.extract_strided_slice %14 {offsets = [0, 0], sizes = [1, 128], strides = [1, 1]} : vector<4x128xf32> to vector<1x128xf32>
      %17 = vector.broadcast %15 : vector<64x1xf32> to vector<64x128xf32>
      %18 = vector.broadcast %16 : vector<1x128xf32> to vector<64x128xf32>
      %19 = arith.mulf %17, %18 : vector<64x128xf32>
      %20 = vector.extract_strided_slice %13 {offsets = [0, 1], sizes = [64, 1], strides = [1, 1]} : vector<64x4xf32> to vector<64x1xf32>
      %21 = vector.extract_strided_slice %14 {offsets = [1, 0], sizes = [1, 128], strides = [1, 1]} : vector<4x128xf32> to vector<1x128xf32>
      %22 = vector.broadcast %20 : vector<64x1xf32> to vector<64x128xf32>
      %23 = vector.broadcast %21 : vector<1x128xf32> to vector<64x128xf32>
      %24 = arith.mulf %22, %23 : vector<64x128xf32>
      %25 = arith.addf %19, %24 : vector<64x128xf32>
      %26 = vector.extract_strided_slice %13 {offsets = [0, 2], sizes = [64, 1], strides = [1, 1]} : vector<64x4xf32> to vector<64x1xf32>
      %27 = vector.extract_strided_slice %14 {offsets = [2, 0], sizes = [1, 128], strides = [1, 1]} : vector<4x128xf32> to vector<1x128xf32>
      %28 = vector.broadcast %26 : vector<64x1xf32> to vector<64x128xf32>
      %29 = vector.broadcast %27 : vector<1x128xf32> to vector<64x128xf32>
      %30 = arith.mulf %28, %29 : vector<64x128xf32>
      %31 = arith.addf %25, %30 : vector<64x128xf32>
      %32 = vector.extract_strided_slice %13 {offsets = [0, 3], sizes = [64, 1], strides = [1, 1]} : vector<64x4xf32> to vector<64x1xf32>
      %33 = vector.extract_strided_slice %14 {offsets = [3, 0], sizes = [1, 128], strides = [1, 1]} : vector<4x128xf32> to vector<1x128xf32>
      %34 = vector.broadcast %32 : vector<64x1xf32> to vector<64x128xf32>
      %35 = vector.broadcast %33 : vector<1x128xf32> to vector<64x128xf32>
      %36 = arith.mulf %34, %35 : vector<64x128xf32>
      %37 = arith.addf %31, %36 : vector<64x128xf32>
      %c0_13 = arith.constant 0 : index
      %c0_14 = arith.constant 0 : index
      %38 = vector.load %arg9[%c0_13, %c0_14] : memref<64x128xf32, #tpu.memory_space<vmem>>, vector<64x128xf32>
      %c0_15 = arith.constant 0 : index
      %39 = memref.load %arg3[%c0_15] : memref<1xf32, #tpu.memory_space<smem>>
      %40 = vector.broadcast %39 : f32 to vector<64x128xf32>
      %41 = arith.mulf %38, %40 : vector<64x128xf32>
      %42 = arith.addf %41, %37 : vector<64x128xf32>
      %c0_16 = arith.constant 0 : index
      %c0_17 = arith.constant 0 : index
      %43 = vector.load %arg8[%c0_16, %c0_17] : memref<1x128xf32, #tpu.memory_space<vmem>>, vector<1x128xf32>
      %44 = vector.broadcast %43 : vector<1x128xf32> to vector<64x128xf32>
      %45 = arith.addf %42, %44 : vector<64x128xf32>
      %c0_18 = arith.constant 0 : index
      %c0_19 = arith.constant 0 : index
      %46 = vector.load %arg9[%c0_18, %c0_19] : memref<64x128xf32, #tpu.memory_space<vmem>>, vector<64x128xf32>
      tpu.vector_store %arg9[%c0_18, %c0_19], %45 {strides = array<i32>} : memref<64x128xf32, #tpu.memory_space<vmem>>, vector<64x128xf32>,
    } else {
    }
    return
  }
  func.func @transform_0(%arg0: i32, %arg1: i32, %arg2: i32) -> i32 {
    %c0_i32 = arith.constant 0 : i32
    %c0_i32_0 = arith.constant 0 : i32
    return %c0_i32 : i32
  }
  func.func @transform_1(%arg0: i32, %arg1: i32, %arg2: i32) -> (i32, i32) {
    %c0_i32 = arith.constant 0 : i32
    return %arg0, %arg2 : i32, i32
  }
  func.func @transform_2(%arg0: i32, %arg1: i32, %arg2: i32) -> (i32, i32) {
    %c0_i32 = arith.constant 0 : i32
    return %arg2, %arg1 : i32, i32
  }
  func.func @transform_3(%arg0: i32, %arg1: i32, %arg2: i32) -> (i32, i32) {
    %c0_i32 = arith.constant 0 : i32
    %c0_i32_0 = arith.constant 0 : i32
    return %arg0, %c0_i32 : i32, i32
  }
  func.func @transform_4(%arg0: i32, %arg1: i32, %arg2: i32) -> (i32, i32) {
    %c0_i32 = arith.constant 0 : i32
    %c0_i32_0 = arith.constant 0 : i32
    return %c0_i32, %arg1 : i32, i32
  }
  func.func @transform_5(%arg0: i32, %arg1: i32, %arg2: i32) -> (i32, i32) {
    %c0_i32 = arith.constant 0 : i32
    %c0_i32_0 = arith.constant 0 : i32
    return %c0_i32, %arg1 : i32, i32
  }
  func.func @transform_6(%arg0: i32, %arg1: i32, %arg2: i32) -> (i32, i32) {
    %c0_i32 = arith.constant 0 : i32
    return %arg0, %arg1 : i32, i32
  }
}

</mosaic_0001>

<llo_original>
// kernel: qlora_forward.1
$region0: #{qlora_forward.1}
  #allocation0 [shape = 'u32[]', space=smem, size = 0x4, offset = 0x4, fixed_abs, tag = 'smem constant byte address 0x4 - core index']
  #allocation1 [shape = 'u32[144,128]{1,0:T(1,128)}', space=vmem, size = 0x12000, scoped, tag = 'internal scratch']
  #allocation2 [shape = 'f32[1]{0:T(128)S(6)}', space=smem, size = 0x200, scoped, tag = 'scoped memory for qlora_forward.1']
  %s0 = inlined_call_operand.<no memory space> [shape: f32[1], index: 0, kind: input, shape index: {}]
  %s1 = inlined_call_operand.vmem [shape: bf16[128,256], index: 1, kind: input, shape index: {}]
  %s2 = inlined_call_operand.vmem [shape: s8[256,256], index: 2, kind: input, shape index: {}]
  %s3 = inlined_call_operand.vmem [shape: f32[128,4], index: 3, kind: input, shape index: {}]
  %s4 = inlined_call_operand.vmem [shape: f32[4,256], index: 4, kind: input, shape index: {}]
  %s5 = inlined_call_operand.vmem [shape: f32[1,256], index: 5, kind: input, shape index: {}]
  %s6 = inlined_call_operand.hbm [shape: f32[128,256], index: 6, kind: output, shape index: {}]
  %s7 = sld [smem:[#allocation0]]
  $region144: #{qlora_forward.1} parent=0
    _
  %s9 = ssub.s32 1, %s7
  %s10 = scalar_select 0, %s9, %s7
  %11 = sst [smem:[#allocation2]] %s0
  $region1: #{qlora_forward.1} parent=0
    #allocation3 [shape = 'u8[32768]{0}', space=vmem, size = 0x8000, scoped, tag = 'input window, operand 1']
    #allocation4 [shape = 'u8[32768]{0}', space=vmem, size = 0x8000, scoped, tag = 'input window, operand 2']
    #allocation5 [shape = 'u8[65536]{0}', space=vmem, size = 0x10000, scoped, tag = 'output window, operand 0']
    #allocation6 [shape = 's32[2]{0}', space=sflag, size = 0x8, scoped, tag = 'scoped memory for qlora_forward.1']
    %12 = vsyncpa [#allocation6], 0
    %s13 = scalar_lea.sflag [#allocation6], 1
    %14 = vsyncpa %s13, 0
    loop: start=0, step=1, limit=10
    $region2: #{qlora_forward.1} parent=1 // loop_pre_header
      _
    $region3: #{qlora_forward.1} parent=1 // loop_header
      %s16 = sphi 0, %s20
      %p17 = scmp.ge.s32.totalorder %s16, 10
      %s23 = sphi 0, %s42
      %s24 = sphi 0, %s38
      %s25 = sphi 0, %s34
      %s26 = sphi 0, %s23
      %s27 = sphi 0, %s24
      %s28 = sphi 0, %s25
      %s29 = sphi 0, %s26
      %s30 = sphi 0, %s27
      %s31 = sphi 0, %s28
      %s43 = sphi 0, %s43
      %s45 = sphi 0, %s43
      %s46 = sphi 0, %s45
      %s60 = sphi 0, %s46
      %s68 = sphi 0, %s70
      %s71 = sphi 0, %s68
      %s72 = sphi 0, %s71
      %s88 = sphi 0, %s72
      %s96 = sphi 0, %s98
      %s99 = sphi 0, %s96
      %s100 = sphi 0, %s99
      %s116 = sphi 0, %s100
      %s122 = sphi 0, %s124
      %s125 = sphi 0, %s122
      %s126 = sphi 0, %s125
      %s142 = sphi 0, %s126
      %s148 = sphi 0, %s150
      %s151 = sphi 0, %s148
      %s152 = sphi 0, %s151
      %s168 = sphi 0, %s152
      %s174 = sphi 0, %s176
      %s177 = sphi 0, %s174
      %s178 = sphi 0, %s177
      %s194 = sphi 0, %s178
      %s202 = sphi 0, %s204
      %s205 = sphi 0, %s202
      %s206 = sphi 0, %s205
      %s222 = sphi 0, %s206
    $region4: #{qlora_forward.1} parent=1 // loop_header_branch
      %19 = sbr.rel (%p17) target = $region8
    $region5: #{qlora_forward.1} parent=1 // loop_body
      %s21 = ssub.s32 %s16, 1
      %s22 = ssub.s32 %s16, 2
      %s32 = sadd.s32 1, %s25
      %p33 = scmp.ge.s32.totalorder %s32, 2
      %s34 = scalar_select %p33, 0, %s32
      %s35 = sadd.s32 1, %s24
      %s36 = scalar_select %p33, %s35, %s24
      %p37 = scmp.ge.s32.totalorder %s36, 2
      %s38 = scalar_select %p37, 0, %s36
      %s39 = sadd.s32 1, %s23
      %s40 = scalar_select %p37, %s39, %s23
      %p41 = scmp.ge.s32.totalorder %s40, 2
      %s42 = scalar_select %p41, 0, %s40
      %s44 = sadd.s32 %s43, 1
      %p47 = scmp.eq.s32.totalorder %s16, 7
      %p48 = scmp.ne.s32.totalorder %s43, %s45
      %p49 = scmp.eq.s32.totalorder %s16, 0
      %p50 = por %p48, %p49
      %p51 = scmp.ne.s32.totalorder %s43, %s45
      %p52 = scmp.eq.s32.totalorder %s21, 7
      %p53 = por %p51, %p52
      %p54 = scmp.ne.s32.totalorder %s45, %s46
      %p55 = scmp.eq.s32.totalorder %s21, 0
      %p56 = por %p54, %p55
      %p57 = scmp.ne.s32.totalorder %s45, %s46
      %p58 = scmp.eq.s32.totalorder %s22, 7
      %p59 = por %p57, %p58
      %p61 = scmp.ne.s32.totalorder %s46, %s60
      %p62 = scmp.eq.s32.totalorder %s22, 0
      %p63 = por %p61, %p62
      %s64 = ssub.s32 %s23, %s42
      %s65 = ssub.s32 %s25, %s34
      %s66 = sor.u32 %s64, %s65
      %p67 = scmp.eq.s32.totalorder %s66, 0
      %s69 = sadd.s32 %s68, 1
      %s70 = scalar_select %p67, %s68, %s69
      %p73 = pneg %p67
      %p74 = scmp.eq.s32.totalorder %s16, 7
      %p75 = por %p73, %p74
      %p76 = scmp.ne.s32.totalorder %s68, %s71
      %p77 = scmp.eq.s32.totalorder %s16, 0
      %p78 = por %p76, %p77
      %p79 = scmp.ne.s32.totalorder %s68, %s71
      %p80 = scmp.eq.s32.totalorder %s21, 7
      %p81 = por %p79, %p80
      %p82 = scmp.ne.s32.totalorder %s71, %s72
      %p83 = scmp.eq.s32.totalorder %s21, 0
      %p84 = por %p82, %p83
      %p85 = scmp.ne.s32.totalorder %s71, %s72
      %p86 = scmp.eq.s32.totalorder %s22, 7
      %p87 = por %p85, %p86
      %p89 = scmp.ne.s32.totalorder %s72, %s88
      %p90 = scmp.eq.s32.totalorder %s22, 0
      %p91 = por %p89, %p90
      %s92 = ssub.s32 %s25, %s34
      %s93 = ssub.s32 %s24, %s38
      %s94 = sor.u32 %s92, %s93
      %p95 = scmp.eq.s32.totalorder %s94, 0
      %s97 = sadd.s32 %s96, 1
      %s98 = scalar_select %p95, %s96, %s97
      %p101 = pneg %p95
      %p102 = scmp.eq.s32.totalorder %s16, 7
      %p103 = por %p101, %p102
      %p104 = scmp.ne.s32.totalorder %s96, %s99
      %p105 = scmp.eq.s32.totalorder %s16, 0
      %p106 = por %p104, %p105
      %p107 = scmp.ne.s32.totalorder %s96, %s99
      %p108 = scmp.eq.s32.totalorder %s21, 7
      %p109 = por %p107, %p108
      %p110 = scmp.ne.s32.totalorder %s99, %s100
      %p111 = scmp.eq.s32.totalorder %s21, 0
      %p112 = por %p110, %p111
      %p113 = scmp.ne.s32.totalorder %s99, %s100
      %p114 = scmp.eq.s32.totalorder %s22, 7
      %p115 = por %p113, %p114
      %p117 = scmp.ne.s32.totalorder %s100, %s116
      %p118 = scmp.eq.s32.totalorder %s22, 0
      %p119 = por %p117, %p118
      %s120 = ssub.s32 %s23, %s42
      %p121 = scmp.eq.s32.totalorder %s120, 0
      %s123 = sadd.s32 %s122, 1
      %s124 = scalar_select %p121, %s122, %s123
      %p127 = pneg %p121
      %p128 = scmp.eq.s32.totalorder %s16, 7
      %p129 = por %p127, %p128
      %p130 = scmp.ne.s32.totalorder %s122, %s125
      %p131 = scmp.eq.s32.totalorder %s16, 0
      %p132 = por %p130, %p131
      %p133 = scmp.ne.s32.totalorder %s122, %s125
      %p134 = scmp.eq.s32.totalorder %s21, 7
      %p135 = por %p133, %p134
      %p136 = scmp.ne.s32.totalorder %s125, %s126
      %p137 = scmp.eq.s32.totalorder %s21, 0
      %p138 = por %p136, %p137
      %p139 = scmp.ne.s32.totalorder %s125, %s126
      %p140 = scmp.eq.s32.totalorder %s22, 7
      %p141 = por %p139, %p140
      %p143 = scmp.ne.s32.totalorder %s126, %s142
      %p144 = scmp.eq.s32.totalorder %s22, 0
      %p145 = por %p143, %p144
      %s146 = ssub.s32 %s24, %s38
      %p147 = scmp.eq.s32.totalorder %s146, 0
      %s149 = sadd.s32 %s148, 1
      %s150 = scalar_select %p147, %s148, %s149
      %p153 = pneg %p147
      %p154 = scmp.eq.s32.totalorder %s16, 7
      %p155 = por %p153, %p154
      %p156 = scmp.ne.s32.totalorder %s148, %s151
      %p157 = scmp.eq.s32.totalorder %s16, 0
      %p158 = por %p156, %p157
      %p159 = scmp.ne.s32.totalorder %s148, %s151
      %p160 = scmp.eq.s32.totalorder %s21, 7
      %p161 = por %p159, %p160
      %p162 = scmp.ne.s32.totalorder %s151, %s152
      %p163 = scmp.eq.s32.totalorder %s21, 0
      %p164 = por %p162, %p163
      %p165 = scmp.ne.s32.totalorder %s151, %s152
      %p166 = scmp.eq.s32.totalorder %s22, 7
      %p167 = por %p165, %p166
      %p169 = scmp.ne.s32.totalorder %s152, %s168
      %p170 = scmp.eq.s32.totalorder %s22, 0
      %p171 = por %p169, %p170
      %s172 = ssub.s32 %s24, %s38
      %p173 = scmp.eq.s32.totalorder %s172, 0
      %s175 = sadd.s32 %s174, 1
      %s176 = scalar_select %p173, %s174, %s175
      %p179 = pneg %p173
      %p180 = scmp.eq.s32.totalorder %s16, 7
      %p181 = por %p179, %p180
      %p182 = scmp.ne.s32.totalorder %s174, %s177
      %p183 = scmp.eq.s32.totalorder %s16, 0
      %p184 = por %p182, %p183
      %p185 = scmp.ne.s32.totalorder %s174, %s177
      %p186 = scmp.eq.s32.totalorder %s21, 7
      %p187 = por %p185, %p186
      %p188 = scmp.ne.s32.totalorder %s177, %s178
      %p189 = scmp.eq.s32.totalorder %s21, 0
      %p190 = por %p188, %p189
      %p191 = scmp.ne.s32.totalorder %s177, %s178
      %p192 = scmp.eq.s32.totalorder %s22, 7
      %p193 = por %p191, %p192
      %p195 = scmp.ne.s32.totalorder %s178, %s194
      %p196 = scmp.eq.s32.totalorder %s22, 0
      %p197 = por %p195, %p196
      %s198 = ssub.s32 %s23, %s42
      %s199 = ssub.s32 %s24, %s38
      %s200 = sor.u32 %s198, %s199
      %p201 = scmp.eq.s32.totalorder %s200, 0
      %s203 = sadd.s32 %s202, 1
      %s204 = scalar_select %p201, %s202, %s203
      %p207 = pneg %p201
      %p208 = scmp.eq.s32.totalorder %s16, 7
      %p209 = por %p207, %p208
      %p210 = scmp.ne.s32.totalorder %s202, %s205
      %p211 = scmp.eq.s32.totalorder %s16, 0
      %p212 = por %p210, %p211
      %p213 = scmp.ne.s32.totalorder %s202, %s205
      %p214 = scmp.eq.s32.totalorder %s21, 7
      %p215 = por %p213, %p214
      %p216 = scmp.ne.s32.totalorder %s205, %s206
      %p217 = scmp.eq.s32.totalorder %s21, 0
      %p218 = por %p216, %p217
      %p219 = scmp.ne.s32.totalorder %s205, %s206
      %p220 = scmp.eq.s32.totalorder %s22, 7
      %p221 = por %p219, %p220
      %p223 = scmp.ne.s32.totalorder %s206, %s222
      %p224 = scmp.eq.s32.totalorder %s22, 0
      %p225 = por %p223, %p224
      %p226 = scmp.le.s32.totalorder 1, %s16
      %p227 = scmp.lt.s32.totalorder %s16, 9
      %p228 = pnand %p226, %p227
      %p229 = pneg %p228
      // Predicated region
      $region9: #{qlora_forward.1} parent=5 // pred_check
        _
      $region10: #{qlora_forward.1} parent=5 // pred_check_branch
        %231 = sbr.rel (%p228) target = $region12
      $region11: #{qlora_forward.1} parent=5 // pred_region
        %s232 = ssub.s32 %s16, 1
        // Predicated region
        $region13: #{qlora_forward.1} parent=11 // pred_check
          %p233 = pneg %p56
        $region14: #{qlora_forward.1} parent=11 // pred_check_branch
          %235 = sbr.rel (%p233) target = $region16
        $region15: #{qlora_forward.1} parent=11 // pred_region
          _
        $region16: #{qlora_forward.1} parent=11 // pred_fallthru
          _
      $region12: #{qlora_forward.1} parent=5 // pred_fallthru
        _
      %p236 = scmp.lt.s32.totalorder %s16, 8
      // Predicated region
      $region17: #{qlora_forward.1} parent=5 // pred_check
        %p237 = pneg %p236
      $region18: #{qlora_forward.1} parent=5 // pred_check_branch
        %239 = sbr.rel (%p237) target = $region20
      $region19: #{qlora_forward.1} parent=5 // pred_region
        // Predicated region
        $region21: #{qlora_forward.1} parent=19 // pred_check
          %p240 = pneg %p78
        $region22: #{qlora_forward.1} parent=19 // pred_check_branch
          %242 = sbr.rel (%p240) target = $region24
        $region23: #{qlora_forward.1} parent=19 // pred_region
          %s243 = sand.u32 %s68, 1
          %s244 = sand.u32 %s68, 1
          %s245 = smul.addr %s244, 32
          %s246 = scalar_lea.vmem [#allocation3], %s245
          %s247 = smul.u32 8, %s23
          %s248 = smul.addr %s247, 2
          %s249 = sadd.s32 %s25, %s248
          %s250 = smul.addr %s249, 4
          %s251 = scalar_lea.vmem %s1, %s250
          // Predicated region
          $region25: #{qlora_forward.1} parent=23 // pred_check
            _
          $region26: #{qlora_forward.1} parent=23 // pred_check_branch
            %253 = sbr.rel (0) target = $region28
          $region27: #{qlora_forward.1} parent=23 // pred_region
            // Predicated region
            $region29: #{qlora_forward.1} parent=27 // pred_check
              _
            $region30: #{qlora_forward.1} parent=27 // pred_check_branch
              %255 = sbr.rel target = $region32
            $region31: #{qlora_forward.1} parent=27 // pred_region
              // Predicated region
              $region44: #{qlora_forward.1} parent=31 // pred_check
                _
              $region45: #{qlora_forward.1} parent=31 // pred_check_branch
                %285 = sbr.rel (0) target = $region47
              $region46: #{qlora_forward.1} parent=31 // pred_region
                loop: start=0, step=1, limit=1
                $region48: #{qlora_forward.1} parent=46 // loop_pre_header
                  _
                $region49: #{qlora_forward.1} parent=46 // loop_header
                  %s287 = sphi 0, %s291
                  %p288 = scmp.ge.s32.totalorder %s287, 1
                  %s292 = sphi %s251, %s251
                  %s293 = sphi %s246, %s246
                $region50: #{qlora_forward.1} parent=46 // loop_header_branch
                  %290 = sbr.rel (%p288) target = $region54
                $region51: #{qlora_forward.1} parent=46 // loop_body
                  _
                $region52: #{qlora_forward.1} parent=46 // loop_footer
                  %s291 = sadd.s32 1, %s287
                $region53: #{qlora_forward.1} parent=46 // loop_footer_branch
                  %286 = sbr.rel target = $region49
                $region54: #{qlora_forward.1} parent=46 // loop_exit
                  _
                %s295 = ssub.s32 16, 1
                loop: start=0, step=1, limit=1
                $region55: #{qlora_forward.1} parent=46 // loop_pre_header
                  _
                $region56: #{qlora_forward.1} parent=46 // loop_header
                  %s297 = sphi 0, %s301
                  %p298 = scmp.ge.s32.totalorder %s297, 1
                  %s302 = sphi %s251, %s251
                  %s303 = sphi %s246, %s246
                $region57: #{qlora_forward.1} parent=46 // loop_header_branch
                  %300 = sbr.rel (%p298) target = $region61
                $region58: #{qlora_forward.1} parent=46 // loop_body
                  %v304 = vld [vmem:[%s302] sm:%s295]
                  %305 = vst [vmem:[%s303] sm:%s295] %v304
                  %v306 = vld [vmem:[%s302 + $0x8] sm:%s295]
                  %307 = vst [vmem:[%s303 + $0x4] sm:%s295] %v306
                  %v308 = vld [vmem:[%s302 + $0x10] sm:%s295]
                  %309 = vst [vmem:[%s303 + $0x8] sm:%s295] %v308
                  %v310 = vld [vmem:[%s302 + $0x18] sm:%s295]
                  %311 = vst [vmem:[%s303 + $0xc] sm:%s295] %v310
                  %v312 = vld [vmem:[%s302 + $0x20] sm:%s295]
                  %313 = vst [vmem:[%s303 + $0x10] sm:%s295] %v312
                  %v314 = vld [vmem:[%s302 + $0x28] sm:%s295]
                  %315 = vst [vmem:[%s303 + $0x14] sm:%s295] %v314
                  %v316 = vld [vmem:[%s302 + $0x30] sm:%s295]
                  %317 = vst [vmem:[%s303 + $0x18] sm:%s295] %v316
                  %v318 = vld [vmem:[%s302 + $0x38] sm:%s295]
                  %319 = vst [vmem:[%s303 + $0x1c] sm:%s295] %v318
                $region59: #{qlora_forward.1} parent=46 // loop_footer
                  %s301 = sadd.s32 1, %s297
                $region60: #{qlora_forward.1} parent=46 // loop_footer_branch
                  %296 = sbr.rel target = $region56
                $region61: #{qlora_forward.1} parent=46 // loop_exit
                  _
              $region47: #{qlora_forward.1} parent=31 // pred_fallthru
                _
            $region32: #{qlora_forward.1} parent=27 // pred_fallthru
              _
            // Predicated region
            $region33: #{qlora_forward.1} parent=27 // pred_check
              _
            $region34: #{qlora_forward.1} parent=27 // pred_check_branch
              %257 = sbr.rel (0) target = $region36
            $region35: #{qlora_forward.1} parent=27 // pred_region
              %s259 = ssub.s32 16, 1
              loop: start=0, step=1, limit=1
              $region37: #{qlora_forward.1} parent=35 // loop_pre_header
                _
              $region38: #{qlora_forward.1} parent=35 // loop_header
                %s261 = sphi 0, %s265
                %p262 = scmp.ge.s32.totalorder %s261, 1
                %s266 = sphi %s251, %s251
                %s267 = sphi %s246, %s246
              $region39: #{qlora_forward.1} parent=35 // loop_header_branch
                %264 = sbr.rel (%p262) target = $region43
              $region40: #{qlora_forward.1} parent=35 // loop_body
                %v268 = vld [vmem:[%s266] sm:%s259]
                %269 = vst [vmem:[%s267] sm:%s259] %v268
                %v270 = vld [vmem:[%s266 + $0x8] sm:%s259]
                %271 = vst [vmem:[%s267 + $0x4] sm:%s259] %v270
                %v272 = vld [vmem:[%s266 + $0x10] sm:%s259]
                %273 = vst [vmem:[%s267 + $0x8] sm:%s259] %v272
                %v274 = vld [vmem:[%s266 + $0x18] sm:%s259]
                %275 = vst [vmem:[%s267 + $0xc] sm:%s259] %v274
                %v276 = vld [vmem:[%s266 + $0x20] sm:%s259]
                %277 = vst [vmem:[%s267 + $0x10] sm:%s259] %v276
                %v278 = vld [vmem:[%s266 + $0x28] sm:%s259]
                %279 = vst [vmem:[%s267 + $0x14] sm:%s259] %v278
                %v280 = vld [vmem:[%s266 + $0x30] sm:%s259]
                %281 = vst [vmem:[%s267 + $0x18] sm:%s259] %v280
                %v282 = vld [vmem:[%s266 + $0x38] sm:%s259]
                %283 = vst [vmem:[%s267 + $0x1c] sm:%s259] %v282
              $region41: #{qlora_forward.1} parent=35 // loop_footer
                %s265 = sadd.s32 1, %s261
              $region42: #{qlora_forward.1} parent=35 // loop_footer_branch
                %260 = sbr.rel target = $region38
              $region43: #{qlora_forward.1} parent=35 // loop_exit
                _
            $region36: #{qlora_forward.1} parent=27 // pred_fallthru
              _
          $region28: #{qlora_forward.1} parent=23 // pred_fallthru
            _
          %320 = vnop
        $region24: #{qlora_forward.1} parent=19 // pred_fallthru
          _
        // Predicated region
        $region62: #{qlora_forward.1} parent=19 // pred_check
          %p321 = pneg %p106
        $region63: #{qlora_forward.1} parent=19 // pred_check_branch
          %323 = sbr.rel (%p321) target = $region65
        $region64: #{qlora_forward.1} parent=19 // pred_region
          %s324 = sand.u32 %s96, 1
          %s325 = sand.u32 %s96, 1
          %s326 = smul.addr %s325, 32
          %s327 = scalar_lea.vmem [#allocation4], %s326
          %s328 = smul.u32 4, %s25
          %s329 = smul.addr %s328, 2
          %s330 = sadd.s32 %s24, %s329
          %s331 = smul.addr %s330, 8
          %s332 = scalar_lea.vmem %s2, %s331
          // Predicated region
          $region66: #{qlora_forward.1} parent=64 // pred_check
            _
          $region67: #{qlora_forward.1} parent=64 // pred_check_branch
            %334 = sbr.rel (0) target = $region69
          $region68: #{qlora_forward.1} parent=64 // pred_region
            // Predicated region
            $region70: #{qlora_forward.1} parent=68 // pred_check
              _
            $region71: #{qlora_forward.1} parent=68 // pred_check_branch
              %336 = sbr.rel (0) target = $region73
            $region72: #{qlora_forward.1} parent=68 // pred_region
              // Predicated region
              $region85: #{qlora_forward.1} parent=72 // pred_check
                _
              $region86: #{qlora_forward.1} parent=72 // pred_check_branch
                %358 = sbr.rel (0) target = $region88
              $region87: #{qlora_forward.1} parent=72 // pred_region
                loop: start=0, step=1, limit=1
                $region89: #{qlora_forward.1} parent=87 // loop_pre_header
                  _
                $region90: #{qlora_forward.1} parent=87 // loop_header
                  %s360 = sphi 0, %s364
                  %p361 = scmp.ge.s32.totalorder %s360, 1
                  %s365 = sphi %s332, %s332
                  %s366 = sphi %s327, %s327
                $region91: #{qlora_forward.1} parent=87 // loop_header_branch
                  %363 = sbr.rel (%p361) target = $region95
                $region92: #{qlora_forward.1} parent=87 // loop_body
                  %v367 = vld [vmem:[%s365] sm:$0xff]
                  %368 = vst [vmem:[%s366] sm:$0xff] %v367
                  %v369 = vld [vmem:[%s365 + $0x10] sm:$0xff]
                  %370 = vst [vmem:[%s366 + $0x8] sm:$0xff] %v369
                  %v371 = vld [vmem:[%s365 + $0x20] sm:$0xff]
                  %372 = vst [vmem:[%s366 + $0x10] sm:$0xff] %v371
                  %v373 = vld [vmem:[%s365 + $0x30] sm:$0xff]
                  %374 = vst [vmem:[%s366 + $0x18] sm:$0xff] %v373
                $region93: #{qlora_forward.1} parent=87 // loop_footer
                  %s364 = sadd.s32 1, %s360
                $region94: #{qlora_forward.1} parent=87 // loop_footer_branch
                  %359 = sbr.rel target = $region90
                $region95: #{qlora_forward.1} parent=87 // loop_exit
                  _
              $region88: #{qlora_forward.1} parent=72 // pred_fallthru
                _
              // Predicated region
              $region96: #{qlora_forward.1} parent=72 // pred_check
                _
              $region97: #{qlora_forward.1} parent=72 // pred_check_branch
                %376 = sbr.rel target = $region99
              $region98: #{qlora_forward.1} parent=72 // pred_region
                _
              $region99: #{qlora_forward.1} parent=72 // pred_fallthru
                _
            $region73: #{qlora_forward.1} parent=68 // pred_fallthru
              _
            // Predicated region
            $region74: #{qlora_forward.1} parent=68 // pred_check
              _
            $region75: #{qlora_forward.1} parent=68 // pred_check_branch
              %338 = sbr.rel target = $region77
            $region76: #{qlora_forward.1} parent=68 // pred_region
              %s340 = ssub.s32 256, 1
              loop: start=0, step=1, limit=1
              $region78: #{qlora_forward.1} parent=76 // loop_pre_header
                _
              $region79: #{qlora_forward.1} parent=76 // loop_header
                %s342 = sphi 0, %s346
                %p343 = scmp.ge.s32.totalorder %s342, 1
                %s347 = sphi %s332, %s332
                %s348 = sphi %s327, %s327
              $region80: #{qlora_forward.1} parent=76 // loop_header_branch
                %345 = sbr.rel (%p343) target = $region84
              $region81: #{qlora_forward.1} parent=76 // loop_body
                %v349 = vld [vmem:[%s347] sm:%s340]
                %350 = vst [vmem:[%s348] sm:%s340] %v349
                %v351 = vld [vmem:[%s347 + $0x10] sm:%s340]
                %352 = vst [vmem:[%s348 + $0x8] sm:%s340] %v351
                %v353 = vld [vmem:[%s347 + $0x20] sm:%s340]
                %354 = vst [vmem:[%s348 + $0x10] sm:%s340] %v353
                %v355 = vld [vmem:[%s347 + $0x30] sm:%s340]
                %356 = vst [vmem:[%s348 + $0x18] sm:%s340] %v355
              $region82: #{qlora_forward.1} parent=76 // loop_footer
                %s346 = sadd.s32 1, %s342
              $region83: #{qlora_forward.1} parent=76 // loop_footer_branch
                %341 = sbr.rel target = $region79
              $region84: #{qlora_forward.1} parent=76 // loop_exit
                _
            $region77: #{qlora_forward.1} parent=68 // pred_fallthru
              _
          $region69: #{qlora_forward.1} parent=64 // pred_fallthru
            _
          %377 = vnop
        $region65: #{qlora_forward.1} parent=19 // pred_fallthru
          _
        // Predicated region
        $region100: #{qlora_forward.1} parent=19 // pred_check
          %p378 = pneg %p132
        $region101: #{qlora_forward.1} parent=19 // pred_check_branch
          %380 = sbr.rel (%p378) target = $region103
        $region102: #{qlora_forward.1} parent=19 // pred_region
          %s381 = smul.u32 8, %s23
          %p382 = scmp.lt.s32.totalorder %s381, 15
          %s383 = scalar_select %p382, %s381, 15
          %s384 = smul.addr %s383, 8
          %s385 = scalar_lea.vmem %s3, %s384
          %s386 = smul.u32 8, %s23
        $region103: #{qlora_forward.1} parent=19 // pred_fallthru
          _
        // Predicated region
        $region104: #{qlora_forward.1} parent=19 // pred_check
          %p387 = pneg %p158
        $region105: #{qlora_forward.1} parent=19 // pred_check_branch
          %389 = sbr.rel (%p387) target = $region107
        $region106: #{qlora_forward.1} parent=19 // pred_region
          %p390 = scmp.lt.s32.totalorder %s24, 1
          %s391 = scalar_select %p390, %s24, 1
          %s392 = smul.addr %s391, 4
          %s393 = scalar_lea.vmem %s4, %s392
        $region107: #{qlora_forward.1} parent=19 // pred_fallthru
          _
        // Predicated region
        $region108: #{qlora_forward.1} parent=19 // pred_check
          %p394 = pneg %p184
        $region109: #{qlora_forward.1} parent=19 // pred_check_branch
          %396 = sbr.rel (%p394) target = $region111
        $region110: #{qlora_forward.1} parent=19 // pred_region
          %p397 = scmp.lt.s32.totalorder %s24, 1
          %s398 = scalar_select %p397, %s24, 1
          %s399 = scalar_lea.vmem %s5, %s398
        $region111: #{qlora_forward.1} parent=19 // pred_fallthru
          _
      $region20: #{qlora_forward.1} parent=5 // pred_fallthru
        _
      %p400 = scmp.le.s32.totalorder 1, %s16
      %p401 = scmp.lt.s32.totalorder %s16, 9
      %p402 = pnand %p400, %p401
      %p403 = pneg %p402
      // Predicated region
      $region112: #{qlora_forward.1} parent=5 // pred_check
        _
      $region113: #{qlora_forward.1} parent=5 // pred_check_branch
        %405 = sbr.rel (%p402) target = $region115
      $region114: #{qlora_forward.1} parent=5 // pred_region
        %s406 = ssub.s32 %s16, 1
        %s407 = sand.u32 %s71, 1
        %s408 = sand.u32 %s71, 1
        %s409 = smul.addr %s408, 32
        %s410 = scalar_lea.vmem [#allocation3], %s409
        // Predicated region
        $region116: #{qlora_forward.1} parent=114 // pred_check
          %p411 = pneg %p84
        $region117: #{qlora_forward.1} parent=114 // pred_check_branch
          %413 = sbr.rel (%p411) target = $region119
        $region118: #{qlora_forward.1} parent=114 // pred_region
          _
        $region119: #{qlora_forward.1} parent=114 // pred_fallthru
          _
        %s414 = sand.u32 %s99, 1
        %s415 = sand.u32 %s99, 1
        %s416 = smul.addr %s415, 32
        %s417 = scalar_lea.vmem [#allocation4], %s416
        // Predicated region
        $region120: #{qlora_forward.1} parent=114 // pred_check
          %p418 = pneg %p112
        $region121: #{qlora_forward.1} parent=114 // pred_check_branch
          %420 = sbr.rel (%p418) target = $region123
        $region122: #{qlora_forward.1} parent=114 // pred_region
          _
        $region123: #{qlora_forward.1} parent=114 // pred_fallthru
          _
        %p421 = pneg %p56
        %p422 = pneg %p53
        %s423 = sand.u32 %s71, 1
        %s424 = sand.u32 %s71, 1
        %s425 = smul.addr %s424, 32
        %s426 = scalar_lea.vmem [#allocation3], %s425
        %p427 = pneg %p84
        %p428 = pneg %p81
        %s429 = sand.u32 %s99, 1
        %s430 = sand.u32 %s99, 1
        %s431 = smul.addr %s430, 32
        %s432 = scalar_lea.vmem [#allocation4], %s431
        %p433 = pneg %p112
        %p434 = pneg %p109
        %s435 = smul.u32 8, %s26
        %p436 = scmp.lt.s32.totalorder %s435, 15
        %s437 = scalar_select %p436, %s435, 15
        %s438 = smul.addr %s437, 8
        %s439 = scalar_lea.vmem %s3, %s438
        %p440 = pneg %p138
        %p441 = pneg %p135
        %p442 = scmp.lt.s32.totalorder %s27, 1
        %s443 = scalar_select %p442, %s27, 1
        %s444 = smul.addr %s443, 4
        %s445 = scalar_lea.vmem %s4, %s444
        %p446 = pneg %p164
        %p447 = pneg %p161
        %p448 = scmp.lt.s32.totalorder %s27, 1
        %s449 = scalar_select %p448, %s27, 1
        %s450 = scalar_lea.vmem %s5, %s449
        %p451 = pneg %p190
        %p452 = pneg %p187
        %p453 = pneg %p218
        %p454 = pneg %p215
        %s455 = sand.u32 %s205, 1
        %s456 = scalar_lea.sflag [#allocation6], %s455
        %s457 = sand.u32 %s205, 1
        %s458 = smul.addr %s457, 64
        %s459 = scalar_lea.vmem [#allocation5], %s458
        %s460 = smul.u32 8, %s26
        %s461 = smul.u32 4, %s28
        %s462 = smul.u32 8, %s26
        %p463 = scmp.lt.s32.totalorder %s462, 15
        %s464 = scalar_select %p463, %s462, 15
        %s465 = smul.addr %s464, 8
        %s466 = scalar_lea.vmem %s3, %s465
        %s467 = smul.u32 8, %s26
        %p468 = scmp.lt.s32.totalorder %s27, 1
        %s469 = scalar_select %p468, %s27, 1
        %s470 = smul.addr %s469, 4
        %s471 = scalar_lea.vmem %s4, %s470
        %p472 = scmp.lt.s32.totalorder %s27, 1
        %s473 = scalar_select %p472, %s27, 1
        %s474 = scalar_lea.vmem %s5, %s473
        %s475 = smul.u32 8, %s26
        %p477 = scmp.eq.s32.totalorder %s28, 0
        // Predicated region
        $region124: #{qlora_forward.1} parent=114 // pred_check
          %p478 = pneg %p477
        $region125: #{qlora_forward.1} parent=114 // pred_check_branch
          %480 = sbr.rel (%p478) target = $region127
        $region126: #{qlora_forward.1} parent=114 // pred_region
          %481 = vst [vmem:[%s459] sm:$0xff] 0.0
          %482 = vst [vmem:[%s459 + $0x8] sm:$0xff] 0.0
          %483 = vst [vmem:[%s459 + $0x10] sm:$0xff] 0.0
          %484 = vst [vmem:[%s459 + $0x18] sm:$0xff] 0.0
          %485 = vst [vmem:[%s459 + $0x20] sm:$0xff] 0.0
          %486 = vst [vmem:[%s459 + $0x28] sm:$0xff] 0.0
          %487 = vst [vmem:[%s459 + $0x30] sm:$0xff] 0.0
          %488 = vst [vmem:[%s459 + $0x38] sm:$0xff] 0.0
        $region127: #{qlora_forward.1} parent=114 // pred_fallthru
          _
        %v489 = vld [vmem:[%s410] sm:$0xf]
        %v490 = vld [vmem:[%s410 + $0x4] sm:$0xf]
        %v491 = vld [vmem:[%s410 + $0x8] sm:$0xf]
        %v492 = vld [vmem:[%s410 + $0xc] sm:$0xf]
        %v493 = vld [vmem:[%s410 + $0x10] sm:$0xf]
        %v494 = vld [vmem:[%s410 + $0x14] sm:$0xf]
        %v495 = vld [vmem:[%s410 + $0x18] sm:$0xf]
        %v496 = vld [vmem:[%s410 + $0x1c] sm:$0xf]
        %v497 = vld [vmem:[%s417] sm:$0xff]
        %v498 = vld [vmem:[%s417 + $0x8] sm:$0xff]
        %v499 = vld [vmem:[%s417 + $0x10] sm:$0xff]
        %v500 = vld [vmem:[%s417 + $0x18] sm:$0xff]
        %v501 = vunpack.c.l.s8.bf16 %v497
        %v502 = vunpack.c.h.s8.bf16 %v497
        %v503 = vunpack.c.l.s8.bf16 %v498
        %v504 = vunpack.c.h.s8.bf16 %v498
        %v505 = vunpack.c.l.s8.bf16 %v499
        %v506 = vunpack.c.h.s8.bf16 %v499
        %v507 = vunpack.c.l.s8.bf16 %v500
        %v508 = vunpack.c.h.s8.bf16 %v500
        %v509 = vld [vmem:[%s459] sm:$0xff]
        %v510 = vld [vmem:[%s459 + $0x8] sm:$0xff]
        %v511 = vld [vmem:[%s459 + $0x10] sm:$0xff]
        %v512 = vld [vmem:[%s459 + $0x18] sm:$0xff]
        %v513 = vld [vmem:[%s459 + $0x20] sm:$0xff]
        %v514 = vld [vmem:[%s459 + $0x28] sm:$0xff]
        %v515 = vld [vmem:[%s459 + $0x30] sm:$0xff]
        %v516 = vld [vmem:[%s459 + $0x38] sm:$0xff]
        %v525 = vunpack.c.l.b16 %v489
        %v526 = vunpack.c.l.b16 %v490
        %v527 = vunpack.c.l.b16 %v491
        %v528 = vunpack.c.l.b16 %v492
        %v529 = vunpack.c.l.b16 %v493
        %v530 = vunpack.c.l.b16 %v494
        %v531 = vunpack.c.l.b16 %v495
        %v532 = vunpack.c.l.b16 %v496
        %v533 = vpack.c.b16 %v526, %v525
        %v534 = vpack.c.b16 %v528, %v527
        %v535 = vpack.c.b16 %v530, %v529
        %v536 = vpack.c.b16 %v532, %v531
        %541 = vmatprep.subr.bf16.mxu0 0
        %542 = vmatpush1.bf16.msra.mxu0 %v508
        %543 = vmatprep.subr.bf16.mxu0 0
        %544 = vmatpush1.bf16.msra.mxu0 %v507
        %545 = vmatprep.subr.bf16.mxu0 0
        %546 = vmatpush1.bf16.msra.mxu0 %v506
        %547 = vmatprep.subr.bf16.mxu0 0
        %548 = vmatpush1.bf16.msra.mxu0 %v505
        %549 = vmatprep.subr.bf16.mxu0 0
        %550 = vmatpush1.bf16.msra.mxu0 %v504
        %551 = vmatprep.subr.bf16.mxu0 0
        %552 = vmatpush1.bf16.msra.mxu0 %v503
        %553 = vmatprep.subr.bf16.mxu0 0
        %554 = vmatpush1.bf16.msra.mxu0 %v502
        %555 = vmatprep.subr.bf16.mxu0 0
        %556 = vmatpush1.bf16.msra.mxu0 %v501
        %557 = vmatprep.subr.bf16.mxu0 0
        %558 = vmatpush2.bf16.msra.mxu0 0
        %559 = vmatprep.subr.bf16.mxu0 0
        %560 = vmatpush2.bf16.msra.mxu0 0
        %561 = vmatprep.subr.bf16.mxu0 0
        %562 = vmatpush2.bf16.msra.mxu0 0
        %563 = vmatprep.subr.bf16.mxu0 0
        %564 = vmatpush2.bf16.msra.mxu0 0
        %565 = vmatprep.subr.bf16.mxu0 0
        %566 = vmatpush2.bf16.msra.mxu0 0
        %567 = vmatprep.subr.bf16.mxu0 0
        %568 = vmatpush2.bf16.msra.mxu0 0
        %569 = vmatprep.subr.bf16.mxu0 0
        %570 = vmatpush2.bf16.msra.mxu0 0
        %571 = vmatprep.subr.bf16.mxu0 0
        %572 = vmatpush2.bf16.msra.mxu0 0
        %573 = vmatprep.mubr.bf16.mxu0 0
        %574 = vmatmul.mubr.bf16.gmra.mxu0 %v533
        %v575 = vpop.f32.mrf.mxu0
        %v576 = vadd.f32 0.0, %v575
        %v577 = vpop.f32.mrf.mxu0
        %v578 = vpop.f32.mrf.mxu0
        %v579 = vadd.f32 0.0, %v578
        %v580 = vpop.f32.mrf.mxu0
        %581 = vmatprep.mubr.bf16.mxu0 0
        %582 = vmatmul.mubr.bf16.gmra.mxu0 %v534
        %v583 = vpop.f32.mrf.mxu0
        %v584 = vadd.f32 0.0, %v583
        %v585 = vpop.f32.mrf.mxu0
        %v586 = vpop.f32.mrf.mxu0
        %v587 = vadd.f32 0.0, %v586
        %v588 = vpop.f32.mrf.mxu0
        %589 = vmatprep.mubr.bf16.mxu0 0
        %590 = vmatmul.mubr.bf16.gmra.mxu0 %v535
        %v591 = vpop.f32.mrf.mxu0
        %v592 = vadd.f32 0.0, %v591
        %v593 = vpop.f32.mrf.mxu0
        %v594 = vpop.f32.mrf.mxu0
        %v595 = vadd.f32 0.0, %v594
        %v596 = vpop.f32.mrf.mxu0
        %597 = vmatprep.mubr.bf16.mxu0 0
        %598 = vmatmul.mubr.bf16.gmra.mxu0 %v536
        %v599 = vpop.f32.mrf.mxu0
        %v600 = vadd.f32 0.0, %v599
        %v601 = vpop.f32.mrf.mxu0
        %v602 = vpop.f32.mrf.mxu0
        %v603 = vadd.f32 0.0, %v602
        %v604 = vpop.f32.mrf.mxu0
        %605 = vdwg.mxu0
        %v606 = vadd.f32 %v509, %v576
        %v607 = vadd.f32 %v510, %v579
        %v608 = vadd.f32 %v511, %v584
        %v609 = vadd.f32 %v512, %v587
        %v610 = vadd.f32 %v513, %v592
        %v611 = vadd.f32 %v514, %v595
        %v612 = vadd.f32 %v515, %v600
        %v613 = vadd.f32 %v516, %v603
        %614 = vst [vmem:[%s459] sm:$0xff] %v606
        %615 = vst [vmem:[%s459 + $0x8] sm:$0xff] %v607
        %616 = vst [vmem:[%s459 + $0x10] sm:$0xff] %v608
        %617 = vst [vmem:[%s459 + $0x18] sm:$0xff] %v609
        %618 = vst [vmem:[%s459 + $0x20] sm:$0xff] %v610
        %619 = vst [vmem:[%s459 + $0x28] sm:$0xff] %v611
        %620 = vst [vmem:[%s459 + $0x30] sm:$0xff] %v612
        %621 = vst [vmem:[%s459 + $0x38] sm:$0xff] %v613
        %p622 = scmp.eq.s32.totalorder %s28, 1
        // Predicated region
        $region128: #{qlora_forward.1} parent=114 // pred_check
          %p623 = pneg %p622
        $region129: #{qlora_forward.1} parent=114 // pred_check_branch
          %625 = sbr.rel (%p623) target = $region131
        $region130: #{qlora_forward.1} parent=114 // pred_region
          %v626 = vld [vmem:[%s466] sm:$0xff]
          %v627 = vld [vmem:[%s466 + $0x8] sm:$0xff]
          %v628 = vld [vmem:[%s466 + $0x10] sm:$0xff]
          %v629 = vld [vmem:[%s466 + $0x18] sm:$0xff]
          %v630 = vld [vmem:[%s466 + $0x20] sm:$0xff]
          %v631 = vld [vmem:[%s466 + $0x28] sm:$0xff]
          %v632 = vld [vmem:[%s466 + $0x30] sm:$0xff]
          %v633 = vld [vmem:[%s466 + $0x38] sm:$0xff]
          %v634 = vld [vmem:[%s471] sm:$0xf]
          %636 = vset.pattern.permute.xlu0 0
          %637 = vperm.xlu0 %636, %v626
          %v638 = vpop.permute.xlu0 %637
          %641 = vset.pattern.permute.xlu0 0
          %642 = vperm.xlu0 %641, %v627
          %v643 = vpop.permute.xlu0 %642
          %646 = vset.pattern.permute.xlu0 0
          %647 = vperm.xlu0 %646, %v628
          %v648 = vpop.permute.xlu0 %647
          %651 = vset.pattern.permute.xlu0 0
          %652 = vperm.xlu0 %651, %v629
          %v653 = vpop.permute.xlu0 %652
          %656 = vset.pattern.permute.xlu0 0
          %657 = vperm.xlu0 %656, %v630
          %v658 = vpop.permute.xlu0 %657
          %661 = vset.pattern.permute.xlu0 0
          %662 = vperm.xlu0 %661, %v631
          %v663 = vpop.permute.xlu0 %662
          %666 = vset.pattern.permute.xlu0 0
          %667 = vperm.xlu0 %666, %v632
          %v668 = vpop.permute.xlu0 %667
          %671 = vset.pattern.permute.xlu0 0
          %672 = vperm.xlu0 %671, %v633
          %v673 = vpop.permute.xlu0 %672
          %v675 = vlaneseq
          %v676 = vshrl.u32 %v675, 7
          %v677 = vsub.s32 0, %v676
          %v678 = vrot.slane %v634, %v677
          %v679 = vmul.f32 %v638, %v678
          %v680 = vmul.f32 %v643, %v678
          %v681 = vmul.f32 %v648, %v678
          %v682 = vmul.f32 %v653, %v678
          %v683 = vmul.f32 %v658, %v678
          %v684 = vmul.f32 %v663, %v678
          %v685 = vmul.f32 %v668, %v678
          %v686 = vmul.f32 %v673, %v678
          %687 = vset.pattern.permute.xlu0 1
          %688 = vperm.xlu0 %687, %v626
          %v689 = vpop.permute.xlu0 %688
          %691 = vset.pattern.permute.xlu0 1
          %692 = vperm.xlu0 %691, %v627
          %v693 = vpop.permute.xlu0 %692
          %695 = vset.pattern.permute.xlu0 1
          %696 = vperm.xlu0 %695, %v628
          %v697 = vpop.permute.xlu0 %696
          %699 = vset.pattern.permute.xlu0 1
          %700 = vperm.xlu0 %699, %v629
          %v701 = vpop.permute.xlu0 %700
          %703 = vset.pattern.permute.xlu0 1
          %704 = vperm.xlu0 %703, %v630
          %v705 = vpop.permute.xlu0 %704
          %707 = vset.pattern.permute.xlu0 1
          %708 = vperm.xlu0 %707, %v631
          %v709 = vpop.permute.xlu0 %708
          %711 = vset.pattern.permute.xlu0 1
          %712 = vperm.xlu0 %711, %v632
          %v713 = vpop.permute.xlu0 %712
          %715 = vset.pattern.permute.xlu0 1
          %716 = vperm.xlu0 %715, %v633
          %v717 = vpop.permute.xlu0 %716
          %v719 = vlaneseq
          %v720 = vshrl.u32 %v719, 7
          %v721 = vsub.s32 1, %v720
          %v722 = vrot.slane %v634, %v721
          %v723 = vmul.f32 %v689, %v722
          %v724 = vmul.f32 %v693, %v722
          %v725 = vmul.f32 %v697, %v722
          %v726 = vmul.f32 %v701, %v722
          %v727 = vmul.f32 %v705, %v722
          %v728 = vmul.f32 %v709, %v722
          %v729 = vmul.f32 %v713, %v722
          %v730 = vmul.f32 %v717, %v722
          %v731 = vadd.f32 %v679, %v723
          %v732 = vadd.f32 %v680, %v724
          %v733 = vadd.f32 %v681, %v725
          %v734 = vadd.f32 %v682, %v726
          %v735 = vadd.f32 %v683, %v727
          %v736 = vadd.f32 %v684, %v728
          %v737 = vadd.f32 %v685, %v729
          %v738 = vadd.f32 %v686, %v730
          %739 = vset.pattern.permute.xlu0 2
          %740 = vperm.xlu0 %739, %v626
          %v741 = vpop.permute.xlu0 %740
          %743 = vset.pattern.permute.xlu0 2
          %744 = vperm.xlu0 %743, %v627
          %v745 = vpop.permute.xlu0 %744
          %747 = vset.pattern.permute.xlu0 2
          %748 = vperm.xlu0 %747, %v628
          %v749 = vpop.permute.xlu0 %748
          %751 = vset.pattern.permute.xlu0 2
          %752 = vperm.xlu0 %751, %v629
          %v753 = vpop.permute.xlu0 %752
          %755 = vset.pattern.permute.xlu0 2
          %756 = vperm.xlu0 %755, %v630
          %v757 = vpop.permute.xlu0 %756
          %759 = vset.pattern.permute.xlu0 2
          %760 = vperm.xlu0 %759, %v631
          %v761 = vpop.permute.xlu0 %760
          %763 = vset.pattern.permute.xlu0 2
          %764 = vperm.xlu0 %763, %v632
          %v765 = vpop.permute.xlu0 %764
          %767 = vset.pattern.permute.xlu0 2
          %768 = vperm.xlu0 %767, %v633
          %v769 = vpop.permute.xlu0 %768
          %v771 = vlaneseq
          %v772 = vshrl.u32 %v771, 7
          %v773 = vsub.s32 2, %v772
          %v774 = vrot.slane %v634, %v773
          %v775 = vmul.f32 %v741, %v774
          %v776 = vmul.f32 %v745, %v774
          %v777 = vmul.f32 %v749, %v774
          %v778 = vmul.f32 %v753, %v774
          %v779 = vmul.f32 %v757, %v774
          %v780 = vmul.f32 %v761, %v774
          %v781 = vmul.f32 %v765, %v774
          %v782 = vmul.f32 %v769, %v774
          %v783 = vadd.f32 %v731, %v775
          %v784 = vadd.f32 %v732, %v776
          %v785 = vadd.f32 %v733, %v777
          %v786 = vadd.f32 %v734, %v778
          %v787 = vadd.f32 %v735, %v779
          %v788 = vadd.f32 %v736, %v780
          %v789 = vadd.f32 %v737, %v781
          %v790 = vadd.f32 %v738, %v782
          %791 = vset.pattern.permute.xlu0 3
          %792 = vperm.xlu0 %791, %v626
          %v793 = vpop.permute.xlu0 %792
          %795 = vset.pattern.permute.xlu0 3
          %796 = vperm.xlu0 %795, %v627
          %v797 = vpop.permute.xlu0 %796
          %799 = vset.pattern.permute.xlu0 3
          %800 = vperm.xlu0 %799, %v628
          %v801 = vpop.permute.xlu0 %800
          %803 = vset.pattern.permute.xlu0 3
          %804 = vperm.xlu0 %803, %v629
          %v805 = vpop.permute.xlu0 %804
          %807 = vset.pattern.permute.xlu0 3
          %808 = vperm.xlu0 %807, %v630
          %v809 = vpop.permute.xlu0 %808
          %811 = vset.pattern.permute.xlu0 3
          %812 = vperm.xlu0 %811, %v631
          %v813 = vpop.permute.xlu0 %812
          %815 = vset.pattern.permute.xlu0 3
          %816 = vperm.xlu0 %815, %v632
          %v817 = vpop.permute.xlu0 %816
          %819 = vset.pattern.permute.xlu0 3
          %820 = vperm.xlu0 %819, %v633
          %v821 = vpop.permute.xlu0 %820
          %v823 = vlaneseq
          %v824 = vshrl.u32 %v823, 7
          %v825 = vsub.s32 3, %v824
          %v826 = vrot.slane %v634, %v825
          %v827 = vmul.f32 %v793, %v826
          %v828 = vmul.f32 %v797, %v826
          %v829 = vmul.f32 %v801, %v826
          %v830 = vmul.f32 %v805, %v826
          %v831 = vmul.f32 %v809, %v826
          %v832 = vmul.f32 %v813, %v826
          %v833 = vmul.f32 %v817, %v826
          %v834 = vmul.f32 %v821, %v826
          %v835 = vadd.f32 %v783, %v827
          %v836 = vadd.f32 %v784, %v828
          %v837 = vadd.f32 %v785, %v829
          %v838 = vadd.f32 %v786, %v830
          %v839 = vadd.f32 %v787, %v831
          %v840 = vadd.f32 %v788, %v832
          %v841 = vadd.f32 %v789, %v833
          %v842 = vadd.f32 %v790, %v834
          %v843 = vld [vmem:[%s459] sm:$0xff]
          %v844 = vld [vmem:[%s459 + $0x8] sm:$0xff]
          %v845 = vld [vmem:[%s459 + $0x10] sm:$0xff]
          %v846 = vld [vmem:[%s459 + $0x18] sm:$0xff]
          %v847 = vld [vmem:[%s459 + $0x20] sm:$0xff]
          %v848 = vld [vmem:[%s459 + $0x28] sm:$0xff]
          %v849 = vld [vmem:[%s459 + $0x30] sm:$0xff]
          %v850 = vld [vmem:[%s459 + $0x38] sm:$0xff]
          %s851 = sld [smem:[#allocation2]]
          %v852 = vstv %s851
          %v853 = vmul.f32 %v843, %v852
          %v854 = vmul.f32 %v844, %v852
          %v855 = vmul.f32 %v845, %v852
          %v856 = vmul.f32 %v846, %v852
          %v857 = vmul.f32 %v847, %v852
          %v858 = vmul.f32 %v848, %v852
          %v859 = vmul.f32 %v849, %v852
          %v860 = vmul.f32 %v850, %v852
          %v861 = vadd.f32 %v853, %v835
          %v862 = vadd.f32 %v854, %v836
          %v863 = vadd.f32 %v855, %v837
          %v864 = vadd.f32 %v856, %v838
          %v865 = vadd.f32 %v857, %v839
          %v866 = vadd.f32 %v858, %v840
          %v867 = vadd.f32 %v859, %v841
          %v868 = vadd.f32 %v860, %v842
          %v869 = vld [vmem:[%s474] sm:$0x1]
          %v871 = vlaneseq
          %v872 = vshrl.u32 %v871, 7
          %v873 = vsub.s32 0, %v872
          %v874 = vrot.slane %v869, %v873
          %v876 = vadd.f32 %v861, %v874
          %v877 = vadd.f32 %v862, %v874
          %v878 = vadd.f32 %v863, %v874
          %v879 = vadd.f32 %v864, %v874
          %v880 = vadd.f32 %v865, %v874
          %v881 = vadd.f32 %v866, %v874
          %v882 = vadd.f32 %v867, %v874
          %v883 = vadd.f32 %v868, %v874
          %884 = vst [vmem:[%s459] sm:$0xff] %v876
          %885 = vst [vmem:[%s459 + $0x8] sm:$0xff] %v877
          %886 = vst [vmem:[%s459 + $0x10] sm:$0xff] %v878
          %887 = vst [vmem:[%s459 + $0x18] sm:$0xff] %v879
          %888 = vst [vmem:[%s459 + $0x20] sm:$0xff] %v880
          %889 = vst [vmem:[%s459 + $0x28] sm:$0xff] %v881
          %890 = vst [vmem:[%s459 + $0x30] sm:$0xff] %v882
          %891 = vst [vmem:[%s459 + $0x38] sm:$0xff] %v883
        $region131: #{qlora_forward.1} parent=114 // pred_fallthru
          _
        %s892 = sand.u32 %s205, 1
        %s893 = scalar_lea.sflag [#allocation6], %s892
        %s894 = sand.u32 %s205, 1
        %s895 = smul.addr %s894, 64
        %s896 = scalar_lea.vmem [#allocation5], %s895
        // Predicated region
        $region132: #{qlora_forward.1} parent=114 // pred_check
          %p897 = pneg %p215
        $region133: #{qlora_forward.1} parent=114 // pred_check_branch
          %899 = sbr.rel (%p897) target = $region135
        $region134: #{qlora_forward.1} parent=114 // pred_region
          %s900 = smul.u32 8, %s26
          %s902 = ssub.s32 1024, 1024
          %903 = vsyncadd %s893, %s902
          %s904 = smul.addr %s900, 2
          %s905 = sadd.s32 %s27, %s904
          %s906 = smul.addr %s905, 128
          %s907 = scalar_lea.hbm %s6, %s906
          %s908 = sshll.u32 %s896, 4
          %s909 = int_to_ptr.vmem [resolvable:$true] %s908
          %914 = dma.vmem_to_hbm [thread:$0]  %s909, 1024, %s907, %s893, 128, 256, 8
        $region135: #{qlora_forward.1} parent=114 // pred_fallthru
          _
      $region115: #{qlora_forward.1} parent=5 // pred_fallthru
        _
      %p915 = scmp.le.s32.totalorder 2, %s16
      // Predicated region
      $region136: #{qlora_forward.1} parent=5 // pred_check
        %p916 = pneg %p915
      $region137: #{qlora_forward.1} parent=5 // pred_check_branch
        %918 = sbr.rel (%p916) target = $region139
      $region138: #{qlora_forward.1} parent=5 // pred_region
        %s919 = ssub.s32 %s16, 2
        // Predicated region
        $region140: #{qlora_forward.1} parent=138 // pred_check
          %p920 = pneg %p221
        $region141: #{qlora_forward.1} parent=138 // pred_check_branch
          %922 = sbr.rel (%p920) target = $region143
        $region142: #{qlora_forward.1} parent=138 // pred_region
          %s923 = sand.u32 %s206, 1
          %s924 = scalar_lea.sflag [#allocation6], %s923
          %s925 = sand.u32 %s206, 1
          %s926 = smul.addr %s925, 64
          %s927 = scalar_lea.vmem [#allocation5], %s926
          %928 = dma.done %s924, 1024
        $region143: #{qlora_forward.1} parent=138 // pred_fallthru
          _
      $region139: #{qlora_forward.1} parent=5 // pred_fallthru
        _
    $region6: #{qlora_forward.1} parent=1 // loop_footer
      %s20 = sadd.s32 1, %s16
    $region7: #{qlora_forward.1} parent=1 // loop_footer_branch
      %15 = sbr.rel target = $region3
    $region8: #{qlora_forward.1} parent=1 // loop_exit
      _
    %929 = vsyncpa [#allocation6], 1
    %s930 = scalar_lea.sflag [#allocation6], 1
    %931 = vsyncpa %s930, 1

</llo_original>
